<compile_context>
chip_gen: v7x
topology: tpu7x:2x2x1
jax: 0.10.0
libtpu: 0.0.40
codegen_flags: <defaults>
</compile_context>

<pallas_src>
import jax
import jax.numpy as jnp
from jax.experimental import pallas as pl
from jax.experimental.pallas import tpu as pltpu


def _ensemble_kernel(x_ref, w1_ref, b1_ref, w2_ref, b2_ref, o_ref):
    """One M-tile; all ensemble heads fused, ensemble mean folded into W2.

    x_ref  : (tm, F)      f32   (cast to bf16 in-kernel for the MXU)
    w1_ref : (F, NH*H)    bf16  per-head W1 concatenated along columns
    b1_ref : (1, NH*H)    f32
    w2_ref : (NH*H, O)    bf16  per-head W2 stacked along rows, pre-scaled by 1/NH
    b2_ref : (1, O)       f32   mean over heads of b2
    o_ref  : (tm, O)      f32
    """
    # in-kernel bf16 cast (rides free VPU slack; keeps the HBM read at f32 only once)
    x = x_ref[...].astype(jnp.bfloat16)
    hid = jnp.dot(x, w1_ref[...], preferred_element_type=jnp.float32)
    # bias-add + ReLU in f32 on the VPU (portable to v5e, which lacks bf16 VPU)
    hid = jnp.maximum(hid + b1_ref[...], 0.0)
    y = jnp.dot(hid.astype(jnp.bfloat16), w2_ref[...],
                preferred_element_type=jnp.float32)
    o_ref[...] = y + b2_ref[...]


def _round_up(x, m):
    return (x + m - 1) // m * m


def pack_ensemble_weights(w1, b1, w2, b2):
    """Pack per-head weights once: fuse heads for W1, fold the ensemble mean into W2."""
    NH, F, H = w1.shape
    O = w2.shape[-1]
    # W1p[:, h*H:(h+1)*H] = w1[h]
    w1p = jnp.transpose(w1, (1, 0, 2)).reshape(F, NH * H).astype(jnp.bfloat16)
    b1p = b1.reshape(1, NH * H).astype(jnp.float32)
    # Fold mean over heads: sum_h relu_h @ w2[h] == hid_concat @ vstack(w2[h]);
    # apply the 1/NH scale in f32 before the bf16 cast (avoids extra bf16 rounding).
    w2f = (w2.reshape(NH * H, O).astype(jnp.float32) / NH).astype(jnp.bfloat16)
    b2f = jnp.mean(b2.astype(jnp.float32), axis=0, keepdims=True)  # (1, O)
    return w1p, b1p, w2f, b2f


def ensemble_predictor(x, w1, b1, w2, b2, *, block_rows=1024):
    """x: (B, S, F) f32.  w1: (NH, F, H), b1: (NH, H), w2: (NH, H, O), b2: (NH, O).
    Returns (B, S, O) f32: mean over heads of relu(x@W1[h]+b1[h]) @ W2[h] + b2[h]."""
    B, S, F = x.shape
    NH, _, H = w1.shape
    O = w2.shape[-1]
    M = B * S

    w1p, b1p, w2f, b2f = pack_ensemble_weights(w1, b1, w2, b2)
    x_flat = x.reshape(M, F)  # stays f32; no wrapper cast, no padding copy

    # M tiling: single "parallel" grid axis. Big tiles amortize per-step overhead,
    # but cap so the grid keeps >=2 steps when possible (v7x has 2 TensorCores).
    tm = max(16, min(block_rows, _round_up(pl.cdiv(M, 2), 16)))
    grid_m = pl.cdiv(M, tm)

    out = pl.pallas_call(
        _ensemble_kernel,
        out_shape=jax.ShapeDtypeStruct((M, O), jnp.float32),
        grid_spec=pltpu.PrefetchScalarGridSpec(
            num_scalar_prefetch=0,
            grid=(grid_m,),
            in_specs=[
                # activations: tiled over M (pipelined / double-buffered; ragged last tile ok)
                pl.BlockSpec((tm, F), lambda i: (i, 0)),
                # fused weights / biases: tiny constant blocks -> fetched once
                pl.BlockSpec((F, NH * H), lambda i: (0, 0)),
                pl.BlockSpec((1, NH * H), lambda i: (0, 0)),
                pl.BlockSpec((NH * H, O), lambda i: (0, 0)),
                pl.BlockSpec((1, O), lambda i: (0, 0)),
            ],
            out_specs=pl.BlockSpec((tm, O), lambda i: (i, 0)),
        ),
        compiler_params=pltpu.CompilerParams(
            dimension_semantics=("parallel",),        # megacore sharding on v7x
            vmem_limit_bytes=32 * 1024 * 1024,        # far under v7x's 64 MiB ceiling
        ),
    )(x_flat, w1p, b1p, w2f, b2f)

    return out.reshape(B, S, O)


def _reference(x, w1, b1, w2, b2):
    # pure-JAX f32 mirror of the PyTorch forward
    ys = []
    for i in range(w1.shape[0]):
        h = jax.nn.relu(x @ w1[i] + b1[i])
        ys.append(h @ w2[i] + b2[i])
    return jnp.mean(jnp.stack(ys, axis=3), axis=3)


if __name__ == "__main__":
    # small shapes consistent with the module
    B, S = 2, 8                    # batch, sequence
    FEATURE_VECTOR_SIZE = 32       # feature_vector_size
    HIDDEN = 32                    # LearningMachine hidden width
    OUTPUT_SIZE = 8                # output_size
    NUM_HEADS = 3                  # num_heads

    key = jax.random.PRNGKey(0)
    kx, k1, k2, k3, k4 = jax.random.split(key, 5)

    x = jax.random.normal(kx, (B, S, FEATURE_VECTOR_SIZE), dtype=jnp.float32)
    w1 = 0.1 * jax.random.normal(
        k1, (NUM_HEADS, FEATURE_VECTOR_SIZE, HIDDEN), dtype=jnp.float32)
    b1 = 0.1 * jax.random.normal(k2, (NUM_HEADS, HIDDEN), dtype=jnp.float32)
    w2 = 0.1 * jax.random.normal(
        k3, (NUM_HEADS, HIDDEN, OUTPUT_SIZE), dtype=jnp.float32)
    b2 = 0.1 * jax.random.normal(k4, (NUM_HEADS, OUTPUT_SIZE), dtype=jnp.float32)

    # jit the whole call so the (already hoisted) weight packing is compiled/cached once
    predictor = jax.jit(ensemble_predictor)
    out = predictor(x, w1, b1, w2, b2)
    out = jax.block_until_ready(out)

    ref = _reference(x, w1, b1, w2, b2)
    assert out.shape == (B, S, OUTPUT_SIZE), out.shape
    # bf16 MXU operands with f32 accumulation -> loosened tolerance vs f32 reference
    assert jnp.allclose(out, ref, atol=2e-2, rtol=2e-2), "mismatch vs reference"

    print("KERNEL_OK")
</pallas_src>

<mosaic_0001>
module attributes {stable_mosaic.version = 11 : i64} {
  func.func @_ensemble_kernel(%arg0: i32, %arg1: memref<16x32xf32, #tpu.memory_space<vmem>>, %arg2: memref<32x96xbf16, #tpu.memory_space<vmem>>, %arg3: memref<1x96xf32, #tpu.memory_space<vmem>>, %arg4: memref<96x8xbf16, #tpu.memory_space<vmem>>, %arg5: memref<1x8xf32, #tpu.memory_space<vmem>>, %arg6: memref<16x8xf32, #tpu.memory_space<vmem>>) attributes {dimension_semantics = [#tpu.dimension_semantics<parallel>], iteration_bounds = array<i64: 1>, scalar_prefetch = 0 : i64, scratch_operands = 0 : i64, tpu.core_type = #tpu.core_type<tc>, window_params = [{transform_indices = @transform_0, window_bounds = array<i64: 16, 32>}, {pipeline_mode = #tpu.pipeline_mode<synchronous>, transform_indices = @transform_1, window_bounds = array<i64: 32, 96>}, {pipeline_mode = #tpu.pipeline_mode<synchronous>, transform_indices = @transform_2, window_bounds = array<i64: 1, 96>}, {pipeline_mode = #tpu.pipeline_mode<synchronous>, transform_indices = @transform_3, window_bounds = array<i64: 96, 8>}, {pipeline_mode = #tpu.pipeline_mode<synchronous>, transform_indices = @transform_4, window_bounds = array<i64: 1, 8>}, {transform_indices = @transform_5, window_bounds = array<i64: 16, 8>}]} {
    %c0 = arith.constant 0 : index
    %c0_0 = arith.constant 0 : index
    %0 = vector.load %arg1[%c0, %c0_0] : memref<16x32xf32, #tpu.memory_space<vmem>>, vector<16x32xf32>
    %1 = arith.truncf %0 : vector<16x32xf32> to vector<16x32xbf16>
    %c0_1 = arith.constant 0 : index
    %c0_2 = arith.constant 0 : index
    %2 = vector.load %arg2[%c0_1, %c0_2] : memref<32x96xbf16, #tpu.memory_space<vmem>>, vector<32x96xbf16>
    %cst = arith.constant dense<0.000000e+00> : vector<16x96xf32>
    %3 = tpu.matmul %1, %2, %cst {dimension_numbers = #tpu.dot_dimension_numbers<[1], [0], [0], [1], [0, 0, 1, 1], [], []>} : vector<16x32xbf16>, vector<32x96xbf16>, vector<16x96xf32> -> vector<16x96xf32>
    %c0_3 = arith.constant 0 : index
    %c0_4 = arith.constant 0 : index
    %4 = vector.load %arg3[%c0_3, %c0_4] : memref<1x96xf32, #tpu.memory_space<vmem>>, vector<1x96xf32>
    %5 = vector.broadcast %4 : vector<1x96xf32> to vector<16x96xf32>
    %6 = arith.addf %3, %5 : vector<16x96xf32>
    %cst_5 = arith.constant 0.000000e+00 : f32
    %7 = vector.broadcast %cst_5 : f32 to vector<16x96xf32>
    %8 = arith.maximumf %6, %7 : vector<16x96xf32>
    %9 = arith.truncf %8 : vector<16x96xf32> to vector<16x96xbf16>
    %c0_6 = arith.constant 0 : index
    %c0_7 = arith.constant 0 : index
    %10 = vector.load %arg4[%c0_6, %c0_7] : memref<96x8xbf16, #tpu.memory_space<vmem>>, vector<96x8xbf16>
    %cst_8 = arith.constant dense<0.000000e+00> : vector<16x8xf32>
    %11 = tpu.matmul %9, %10, %cst_8 {dimension_numbers = #tpu.dot_dimension_numbers<[1], [0], [0], [1], [0, 0, 1, 1], [], []>} : vector<16x96xbf16>, vector<96x8xbf16>, vector<16x8xf32> -> vector<16x8xf32>
    %c0_9 = arith.constant 0 : index
    %c0_10 = arith.constant 0 : index
    %12 = vector.load %arg5[%c0_9, %c0_10] : memref<1x8xf32, #tpu.memory_space<vmem>>, vector<1x8xf32>
    %13 = vector.broadcast %12 : vector<1x8xf32> to vector<16x8xf32>
    %14 = arith.addf %11, %13 : vector<16x8xf32>
    %c0_11 = arith.constant 0 : index
    %c0_12 = arith.constant 0 : index
    %15 = vector.load %arg6[%c0_11, %c0_12] : memref<16x8xf32, #tpu.memory_space<vmem>>, vector<16x8xf32>
    tpu.vector_store %arg6[%c0_11, %c0_12], %14 {strides = array<i32>} : memref<16x8xf32, #tpu.memory_space<vmem>>, vector<16x8xf32>,
    return
  }
  func.func @transform_0(%arg0: i32) -> (i32, i32) {
    %c0_i32 = arith.constant 0 : i32
    %c0_i32_0 = arith.constant 0 : i32
    return %arg0, %c0_i32 : i32, i32
  }
  func.func @transform_1(%arg0: i32) -> (i32, i32) {
    %c0_i32 = arith.constant 0 : i32
    %c0_i32_0 = arith.constant 0 : i32
    %c0_i32_1 = arith.constant 0 : i32
    return %c0_i32, %c0_i32_0 : i32, i32
  }
  func.func @transform_2(%arg0: i32) -> (i32, i32) {
    %c0_i32 = arith.constant 0 : i32
    %c0_i32_0 = arith.constant 0 : i32
    %c0_i32_1 = arith.constant 0 : i32
    return %c0_i32, %c0_i32_0 : i32, i32
  }
  func.func @transform_3(%arg0: i32) -> (i32, i32) {
    %c0_i32 = arith.constant 0 : i32
    %c0_i32_0 = arith.constant 0 : i32
    %c0_i32_1 = arith.constant 0 : i32
    return %c0_i32, %c0_i32_0 : i32, i32
  }
  func.func @transform_4(%arg0: i32) -> (i32, i32) {
    %c0_i32 = arith.constant 0 : i32
    %c0_i32_0 = arith.constant 0 : i32
    %c0_i32_1 = arith.constant 0 : i32
    return %c0_i32, %c0_i32_0 : i32, i32
  }
  func.func @transform_5(%arg0: i32) -> (i32, i32) {
    %c0_i32 = arith.constant 0 : i32
    %c0_i32_0 = arith.constant 0 : i32
    return %arg0, %c0_i32 : i32, i32
  }
}

</mosaic_0001>

<llo_original>
// kernel: ensemble_predictor.1
$region0: #{ensemble_predictor.1}
  #allocation0 [shape = 'u32[]', space=smem, size = 0x4, offset = 0x4, fixed_abs, tag = 'smem constant byte address 0x4 - core index']
  #allocation1 [shape = 'u32[144,128]{1,0:T(1,128)}', space=vmem, size = 0x12000, scoped, tag = 'internal scratch']
  %s0 = inlined_call_operand.vmem [shape: f32[16,32], index: 0, kind: input, shape index: {}]
  %s1 = inlined_call_operand.vmem [shape: bf16[32,96], index: 1, kind: input, shape index: {}]
  %s2 = inlined_call_operand.vmem [shape: f32[1,96], index: 2, kind: input, shape index: {}]
  %s3 = inlined_call_operand.vmem [shape: bf16[96,8], index: 3, kind: input, shape index: {}]
  %s4 = inlined_call_operand.vmem [shape: f32[1,8], index: 4, kind: input, shape index: {}]
  %s5 = inlined_call_operand.hbm [shape: f32[16,8], index: 5, kind: output, shape index: {}]
  %s6 = sld [smem:[#allocation0]]
  $region30: #{ensemble_predictor.1} parent=0
    _
  %s8 = ssub.s32 1, %s6
  %s9 = scalar_select 0, %s8, %s6
  $region1: #{ensemble_predictor.1} parent=0
    #allocation2 [shape = 'u8[8192]{0}', space=vmem, size = 0x2000, scoped, tag = 'output window, operand 0, single buffered']
    #allocation3 [shape = 's32[1]{0}', space=sflag, size = 0x4, scoped, tag = 'scoped memory for ensemble_predictor.1']
    %10 = vsyncpa [#allocation3], 0
    // Predicated region
    $region2: #{ensemble_predictor.1} parent=1 // pred_check
      _
    $region3: #{ensemble_predictor.1} parent=1 // pred_check_branch
      %12 = sbr.rel (0) target = $region5
    $region4: #{ensemble_predictor.1} parent=1 // pred_region
      _
    $region5: #{ensemble_predictor.1} parent=1 // pred_fallthru
      _
    // Predicated region
    $region6: #{ensemble_predictor.1} parent=1 // pred_check
      _
    $region7: #{ensemble_predictor.1} parent=1 // pred_check_branch
      %14 = sbr.rel (0) target = $region9
    $region8: #{ensemble_predictor.1} parent=1 // pred_region
      _
    $region9: #{ensemble_predictor.1} parent=1 // pred_fallthru
      _
    // Predicated region
    $region10: #{ensemble_predictor.1} parent=1 // pred_check
      _
    $region11: #{ensemble_predictor.1} parent=1 // pred_check_branch
      %16 = sbr.rel (0) target = $region13
    $region12: #{ensemble_predictor.1} parent=1 // pred_region
      _
    $region13: #{ensemble_predictor.1} parent=1 // pred_fallthru
      _
    // Predicated region
    $region14: #{ensemble_predictor.1} parent=1 // pred_check
      _
    $region15: #{ensemble_predictor.1} parent=1 // pred_check_branch
      %18 = sbr.rel (0) target = $region17
    $region16: #{ensemble_predictor.1} parent=1 // pred_region
      _
    $region17: #{ensemble_predictor.1} parent=1 // pred_fallthru
      _
    // Predicated region
    $region18: #{ensemble_predictor.1} parent=1 // pred_check
      _
    $region19: #{ensemble_predictor.1} parent=1 // pred_check_branch
      %20 = sbr.rel (0) target = $region21
    $region20: #{ensemble_predictor.1} parent=1 // pred_region
      _
    $region21: #{ensemble_predictor.1} parent=1 // pred_fallthru
      _
    %v22 = vld [vmem:[%s0] sm:$0xff]
    %v23 = vld [vmem:[%s0 + $0x8] sm:$0xff]
    %v24 = vpack.c.bf16 %v23, %v22
    %v25 = vld [vmem:[%s1] sm:$0xf]
    %v26 = vld [vmem:[%s1 + $0x4] sm:$0xf]
    %v27 = vld [vmem:[%s1 + $0x8] sm:$0xf]
    %v28 = vld [vmem:[%s1 + $0xc] sm:$0xf]
    %v29 = vld [vmem:[%s2] sm:$0x1]
    %v31 = vlaneseq
    %v32 = vshrl.u32 %v31, 7
    %v33 = vsub.s32 0, %v32
    %v34 = vrot.slane %v29, %v33
    %v40 = vunpack.c.l.b16 %v25
    %v41 = vunpack.c.l.b16 %v26
    %v42 = vunpack.c.l.b16 %v27
    %v43 = vunpack.c.l.b16 %v28
    %v44 = vpack.c.b16 %v41, %v40
    %v45 = vpack.c.b16 %v43, %v42
    %vm48 = vcmask 261120
    %v50 = vsel %vm48, %v24, 0
    %52 = vmatprep.subr.bf16.mxu0 0
    %53 = vmatpush1.bf16.msra.mxu0 %v44
    %54 = vmatprep.subr.bf16.mxu0 0
    %55 = vmatpush1.bf16.msra.mxu0 %v45
    %56 = vmatprep.subr.bf16.mxu0 0
    %57 = vmatpush1.bf16.msra.mxu0 0
    %58 = vmatprep.subr.bf16.mxu0 0
    %59 = vmatpush1.bf16.msra.mxu0 0
    %60 = vmatprep.subr.bf16.mxu0 0
    %61 = vmatpush1.bf16.msra.mxu0 0
    %62 = vmatprep.subr.bf16.mxu0 0
    %63 = vmatpush1.bf16.msra.mxu0 0
    %64 = vmatprep.subr.bf16.mxu0 0
    %65 = vmatpush1.bf16.msra.mxu0 0
    %66 = vmatprep.subr.bf16.mxu0 0
    %67 = vmatpush1.bf16.msra.mxu0 0
    %68 = vmatprep.subr.bf16.mxu0 0
    %69 = vmatpush1.bf16.msra.mxu0 0
    %70 = vmatprep.subr.bf16.mxu0 0
    %71 = vmatpush1.bf16.msra.mxu0 0
    %72 = vmatprep.subr.bf16.mxu0 0
    %73 = vmatpush1.bf16.msra.mxu0 0
    %74 = vmatprep.subr.bf16.mxu0 0
    %75 = vmatpush1.bf16.msra.mxu0 0
    %76 = vmatprep.subr.bf16.mxu0 0
    %77 = vmatpush1.bf16.msra.mxu0 0
    %78 = vmatprep.subr.bf16.mxu0 0
    %79 = vmatpush1.bf16.msra.mxu0 0
    %80 = vmatprep.subr.bf16.mxu0 0
    %81 = vmatpush1.bf16.msra.mxu0 0
    %82 = vmatprep.subr.bf16.mxu0 0
    %83 = vmatpush1.bf16.msra.mxu0 0
    %84 = vmatprep.mubr.bf16.mxu0 0
    %85 = vmatmul.mubr.bf16.gmra.mrb[0].mxu0 %v50
    %v86 = vpop.f32.mrb[0].mxu0
    %v87 = vadd.f32 %v34, %v86
    %v88 = vpop.f32.mrb[0].mxu0
    %v89 = vpop.f32.mrb[0].mxu0
    %v90 = vadd.f32 %v34, %v89
    %v91 = vpop.f32.mrb[0].mxu0
    %92 = vdwg.mxu0
    %v93 = vmax.f32 %v87, 0.0
    %v94 = vmax.f32 %v90, 0.0
    %v95 = vpack.c.bf16 %v94, %v93
    %v96 = vld [vmem:[%s3] sm:$0xf]
    %v97 = vld [vmem:[%s3 + $0x4] sm:$0xf]
    %v98 = vld [vmem:[%s3 + $0x8] sm:$0xf]
    %v99 = vld [vmem:[%s3 + $0xc] sm:$0xf]
    %v100 = vld [vmem:[%s3 + $0x10] sm:$0xf]
    %v101 = vld [vmem:[%s3 + $0x14] sm:$0xf]
    %v102 = vld [vmem:[%s3 + $0x18] sm:$0xf]
    %v103 = vld [vmem:[%s3 + $0x1c] sm:$0xf]
    %v104 = vld [vmem:[%s3 + $0x20] sm:$0xf]
    %v105 = vld [vmem:[%s3 + $0x24] sm:$0xf]
    %v106 = vld [vmem:[%s3 + $0x28] sm:$0xf]
    %v107 = vld [vmem:[%s3 + $0x2c] sm:$0xf]
    %v108 = vld [vmem:[%s4] sm:$0x1]
    %v110 = vlaneseq
    %v111 = vshrl.u32 %v110, 7
    %v112 = vsub.s32 0, %v111
    %v113 = vrot.slane %v108, %v112
    %v127 = vunpack.c.l.b16 %v96
    %v128 = vunpack.c.l.b16 %v97
    %v129 = vunpack.c.l.b16 %v98
    %v130 = vunpack.c.l.b16 %v99
    %v131 = vunpack.c.l.b16 %v100
    %v132 = vunpack.c.l.b16 %v101
    %v133 = vunpack.c.l.b16 %v102
    %v134 = vunpack.c.l.b16 %v103
    %v135 = vunpack.c.l.b16 %v104
    %v136 = vunpack.c.l.b16 %v105
    %v137 = vunpack.c.l.b16 %v106
    %v138 = vunpack.c.l.b16 %v107
    %v139 = vpack.c.b16 %v128, %v127
    %v140 = vpack.c.b16 %v130, %v129
    %v141 = vpack.c.b16 %v132, %v131
    %v142 = vpack.c.b16 %v134, %v133
    %v143 = vpack.c.b16 %v136, %v135
    %v144 = vpack.c.b16 %v138, %v137
    %vm151 = vcmask 785408
    %v153 = vsel %vm151, %v95, 0
    %155 = vmatprep.subr.bf16.mxu0 0
    %156 = vmatpush1.bf16.msra.mxu0 %v139
    %157 = vmatprep.subr.bf16.mxu0 0
    %158 = vmatpush1.bf16.msra.mxu0 %v140
    %159 = vmatprep.subr.bf16.mxu0 0
    %160 = vmatpush1.bf16.msra.mxu0 %v141
    %161 = vmatprep.subr.bf16.mxu0 0
    %162 = vmatpush1.bf16.msra.mxu0 %v142
    %163 = vmatprep.subr.bf16.mxu0 0
    %164 = vmatpush1.bf16.msra.mxu0 %v143
    %165 = vmatprep.subr.bf16.mxu0 0
    %166 = vmatpush1.bf16.msra.mxu0 %v144
    %167 = vmatprep.subr.bf16.mxu0 0
    %168 = vmatpush1.bf16.msra.mxu0 0
    %169 = vmatprep.subr.bf16.mxu0 0
    %170 = vmatpush1.bf16.msra.mxu0 0
    %171 = vmatprep.subr.bf16.mxu0 0
    %172 = vmatpush1.bf16.msra.mxu0 0
    %173 = vmatprep.subr.bf16.mxu0 0
    %174 = vmatpush1.bf16.msra.mxu0 0
    %175 = vmatprep.subr.bf16.mxu0 0
    %176 = vmatpush1.bf16.msra.mxu0 0
    %177 = vmatprep.subr.bf16.mxu0 0
    %178 = vmatpush1.bf16.msra.mxu0 0
    %179 = vmatprep.subr.bf16.mxu0 0
    %180 = vmatpush1.bf16.msra.mxu0 0
    %181 = vmatprep.subr.bf16.mxu0 0
    %182 = vmatpush1.bf16.msra.mxu0 0
    %183 = vmatprep.subr.bf16.mxu0 0
    %184 = vmatpush1.bf16.msra.mxu0 0
    %185 = vmatprep.subr.bf16.mxu0 0
    %186 = vmatpush1.bf16.msra.mxu0 0
    %187 = vmatprep.mubr.bf16.mxu0 0
    %188 = vmatmul.mubr.bf16.gmra.mrb[0].mxu0 %v153
    %v189 = vpop.f32.mrb[0].mxu0
    %v190 = vadd.f32 %v113, %v189
    %v191 = vpop.f32.mrb[0].mxu0
    %v192 = vpop.f32.mrb[0].mxu0
    %v193 = vadd.f32 %v113, %v192
    %v194 = vpop.f32.mrb[0].mxu0
    %195 = vdwg.mxu0
    %vm196 = vcmask 64512
    %197 = vst.msk [vmem:[#allocation2] sm:$0xff] %vm196, %v190
    %198 = vst.msk [vmem:[#allocation2 + $0x8] sm:$0xff] %vm196, %v193
    // Predicated region
    $region22: #{ensemble_predictor.1} parent=1 // pred_check
      _
    $region23: #{ensemble_predictor.1} parent=1 // pred_check_branch
      %200 = sbr.rel (0) target = $region25
    $region24: #{ensemble_predictor.1} parent=1 // pred_region
      %s202 = ssub.s32 256, 256
      %203 = vsyncadd [#allocation3], %s202
      %s204 = sshll.u32 [#allocation2], 4
      %s205 = int_to_ptr.vmem [resolvable:$true] %s204
      %210 = dma.vmem_to_hbm [thread:$0]  %s205, 256, %s5, [#allocation3], 128, 128, 8
    $region25: #{ensemble_predictor.1} parent=1 // pred_fallthru
      _
    // Predicated region
    $region26: #{ensemble_predictor.1} parent=1 // pred_check
      _
    $region27: #{ensemble_predictor.1} parent=1 // pred_check_branch
      %212 = sbr.rel (0) target = $region29
    $region28: #{ensemble_predictor.1} parent=1 // pred_region
      %213 = dma.done [#allocation3], 256
    $region29: #{ensemble_predictor.1} parent=1 // pred_fallthru
      _
    %214 = vsyncpa [#allocation3], 1

</llo_original>
